<compile_context>
chip_gen: v7x
topology: tpu7x:2x2x1
jax: 0.10.0
libtpu: 0.0.40
codegen_flags: <defaults>
</compile_context>

<pallas_src>
import jax
import jax.numpy as jnp
from jax import lax
from jax.experimental import pallas as pl
from jax.experimental.pallas import tpu as pltpu


def _round_up(x: int, m: int) -> int:
    return ((x + m - 1) // m) * m


def _vmem_capacity_bytes() -> int:
    """Physical VMEM per TensorCore (best effort; conservative fallback)."""
    try:
        return int(pltpu.get_tpu_info().vmem_capacity_bytes)
    except Exception:
        try:
            kind = jax.devices()[0].device_kind.lower()
        except Exception:
            return 64 << 20
        if "v7" in kind:
            return 64 << 20          # v7x: 64 MiB per TC
        return 128 << 20             # v4/v5e/v5p/v6e: 128 MiB


def _choose_tb(B: int, block_b: int) -> int:
    """Batch tile: minimal padding for small B; 256-row (MXU-width) tiles and
    >=2 grid steps (v7x megacore) once the batch is large enough."""
    b8 = _round_up(B, 8)
    if b8 <= block_b:
        if b8 < 512:
            return b8                               # one step; too small to split usefully
        return _round_up(pl.cdiv(b8, 2), 256)       # >=2 steps at 256 granularity
    tb = (block_b // 256) * 256 if block_b >= 256 else block_b
    return max(tb, 8)


def _make_kernel(num_layers: int, use_l2norm: bool):
    """Fused FeatureExtract kernel.

    Ref order:
      x_ref,
      w0, b0, ..., w_{L-1}, b_{L-1},    # feature MLP (weights pre-transposed)
      w_vis,                            # visualized_linear (pre-transposed)
      [scale_ref],                      # (1,1) SMEM scalar, only if use_l2norm
      out_ref, vis_ref                  # outputs, in out_shape order
    """

    def kernel(*refs):
        x_ref = refs[0]
        idx = 1
        layer_refs = refs[idx: idx + 2 * num_layers]
        idx += 2 * num_layers
        w_vis_ref = refs[idx]
        idx += 1
        scale_ref = refs[idx] if use_l2norm else None
        out_ref, vis_ref = refs[-2], refs[-1]      # same order as out_shape

        h = x_ref[...]
        # Hot path: chain of bf16 matmuls (f32 accumulate) + bias + ReLU.
        for i in range(num_layers):
            w = layer_refs[2 * i][...]
            b = layer_refs[2 * i + 1][...]          # (1, D_pad) broadcasts over rows
            h = jnp.dot(h.astype(w.dtype), w,
                        preferred_element_type=jnp.float32) + b
            h = jnp.maximum(h, 0.0)

        w_vis = w_vis_ref[...]
        vis = jnp.dot(h.astype(w_vis.dtype), w_vis,
                      preferred_element_type=jnp.float32)
        vis_ref[...] = vis                          # == module's self.vis_output

        if use_l2norm:
            scale = scale_ref[0, 0]
            # torch.linalg.norm(out, dim=1, keepdim=True): per-row L2 norm.
            # NOTE: an all-zero row yields NaN, same as the reference's
            # divide-by-zero; add an epsilon here if that matters in prod.
            sumsq = jnp.sum(vis * vis, axis=1, keepdims=True)
            inv = lax.rsqrt(sumsq)                  # EUP; == 1 / ||vis||_2
            out_ref[...] = vis * (inv * scale)
        else:
            out_ref[...] = vis

    return kernel


def feature_extract(x, weights, biases, w_vis, l2_scale, *,
                    use_l2norm=True, weight_dtype=jnp.bfloat16, block_b=512):
    """Fused forward of FeatureExtract.

    x:       (B, D)  with D = input_size**2
    weights: list of (D, D)  -- already transposed so y = x @ W
    biases:  list of (1, D)
    w_vis:   (D, O)          -- already transposed, no bias
    Returns (out, vis_output), both (B, O) float32.
    """
    num_layers = len(weights)
    B, D = x.shape
    O = w_vis.shape[1]

    # Lane-dense padding: last dims to multiples of 128; batch tile mult of 8.
    D_pad = _round_up(D, 128)
    O_pad = _round_up(O, 128)
    TB = _choose_tb(B, block_b)
    B_pad = _round_up(B, TB)
    grid = (B_pad // TB,)

    x_p = jnp.pad(x.astype(jnp.float32),
                  ((0, B_pad - B), (0, D_pad - D))).astype(weight_dtype)

    params_w = []
    for w, b in zip(weights, biases):
        params_w.append(jnp.pad(w, ((0, D_pad - D), (0, D_pad - D))).astype(weight_dtype))
        params_w.append(jnp.pad(b, ((0, 0), (0, D_pad - D))).astype(jnp.float32))
    w_vis_p = jnp.pad(w_vis, ((0, D_pad - D), (0, O_pad - O))).astype(weight_dtype)
    scale_p = (jnp.asarray(l2_scale, jnp.float32).reshape(1, 1)
               if use_l2norm else None)

    # --- VMEM budget -------------------------------------------------------
    w_isz = jnp.dtype(weight_dtype).itemsize
    wbytes_1x = ((num_layers * D_pad * D_pad + D_pad * O_pad) * w_isz
                 + num_layers * D_pad * 4)                 # weights + f32 biases (1x)
    abytes = (2 * TB * D_pad * w_isz                       # double-buffered x tiles
              + 2 * 2 * TB * O_pad * 4                     # 2 double-buffered f32 outputs
              + 2 * TB * D_pad * 4)                        # f32 h-chain intermediates
    phys = _vmem_capacity_bytes()
    # Leave headroom under v7x's 64 MiB; allow up to ~110 MiB on 128 MiB chips.
    cap = (phys - (16 << 20)) if phys <= (64 << 20) else min(phys - (20 << 20),
                                                             110 << 20)

    # --- Cost estimate for XLA scheduling ----------------------------------
    flops = 2 * B_pad * D_pad * (num_layers * D_pad + O_pad)
    bytes_accessed = (B_pad * D_pad * w_isz + wbytes_1x + 2 * B_pad * O_pad * 4)
    cost = pl.CostEstimate(flops=flops,
                           transcendentals=(B_pad if use_l2norm else 0),
                           bytes_accessed=bytes_accessed)

    kernel = _make_kernel(num_layers, use_l2norm)
    x_spec = pl.BlockSpec((TB, D_pad), lambda i: (i, 0))
    out_spec = pl.BlockSpec((TB, O_pad), lambda i: (i, 0))

    def _call(single_buffer_weights: bool):
        if single_buffer_weights:
            pin = dict(pipeline_mode=pl.Buffered(1))   # pinned: no double buffer
            w_mult = 1
        else:
            pin = {}
            w_mult = 2
        w_spec = pl.BlockSpec((D_pad, D_pad), lambda i: (0, 0), **pin)
        b_spec = pl.BlockSpec((1, D_pad), lambda i: (0, 0), **pin)
        wv_spec = pl.BlockSpec((D_pad, O_pad), lambda i: (0, 0), **pin)

        in_specs = [x_spec]
        args = [x_p]
        for _ in range(num_layers):
            in_specs += [w_spec, b_spec]
        args += params_w
        in_specs.append(wv_spec)
        args.append(w_vis_p)
        if use_l2norm:
            in_specs.append(pl.BlockSpec((1, 1), lambda i: (0, 0),
                                         memory_space=pltpu.MemorySpace.SMEM))
            args.append(scale_p)

        vmem_limit = int(min(max(w_mult * wbytes_1x + abytes + (4 << 20),
                                 16 << 20), cap))

        out_p, vis_p = pl.pallas_call(
            kernel,
            grid=grid,
            out_shape=(
                jax.ShapeDtypeStruct((B_pad, O_pad), jnp.float32),   # out
                jax.ShapeDtypeStruct((B_pad, O_pad), jnp.float32),   # vis_output
            ),
            in_specs=in_specs,
            out_specs=(out_spec, out_spec),
            compiler_params=pltpu.CompilerParams(
                dimension_semantics=("parallel",),
                vmem_limit_bytes=vmem_limit,
            ),
            cost_estimate=cost,
        )(*args)
        return jax.block_until_ready((out_p, vis_p))

    try:
        out_p, vis_p = _call(True)
    except Exception:
        # Fallback: default (double-buffered) pipeline mode for pinned weights.
        out_p, vis_p = _call(False)

    return out_p[:B, :O], vis_p[:B, :O]


def _init_params(key, num_layers, input_size, output_size):
    """Deterministic synthetic parameters (PyTorch-Linear-style uniform init)."""
    D = input_size ** 2
    O = output_size
    bound = 1.0 / (D ** 0.5)
    weights, biases = [], []
    for _ in range(num_layers):
        key, kw, kb = jax.random.split(key, 3)
        # PyTorch Linear weight is (out, in); store transposed (in, out) for x @ W.
        weights.append(jax.random.uniform(kw, (D, D), jnp.float32, -bound, bound))
        biases.append(jax.random.uniform(kb, (1, D), jnp.float32, -bound, bound))
    key, kv = jax.random.split(key)
    w_vis = jax.random.uniform(kv, (D, O), jnp.float32, -bound, bound)
    return weights, biases, w_vis


def _reference(x, weights, biases, w_vis, l2_scale, use_l2norm,
               compute_dtype=jnp.float32):
    """Pure-JAX reference; compute_dtype=bf16 mirrors the kernel's MXU path."""
    h = x
    for w, b in zip(weights, biases):
        h = jnp.dot(h.astype(compute_dtype), w.astype(compute_dtype),
                    preferred_element_type=jnp.float32) + b
        h = jnp.maximum(h, 0.0)
    vis = jnp.dot(h.astype(compute_dtype), w_vis.astype(compute_dtype),
                  preferred_element_type=jnp.float32)
    out = vis
    if use_l2norm:
        out = vis / jnp.linalg.norm(vis, axis=1, keepdims=True) * l2_scale
    return out, vis


if __name__ == "__main__":
    # Small shapes consistent with the module: input_size=4 -> D=16 features.
    num_layers = 2
    input_size = 4           # feature dim D = input_size**2 = 16
    output_size = 8          # visualized_linear output O = 8
    batch = 8
    use_l2norm = True
    l2_scale = 2.5

    key = jax.random.PRNGKey(0)
    key, kx = jax.random.split(key)
    x = jax.random.normal(kx, (batch, input_size ** 2), jnp.float32)

    weights, biases, w_vis = _init_params(key, num_layers, input_size, output_size)

    out, vis = feature_extract(
        x, weights, biases, w_vis, l2_scale, use_l2norm=use_l2norm
    )
    out = jax.block_until_ready(out)
    vis = jax.block_until_ready(vis)

    # Reference follows the same bf16-input / f32-accumulate path as the kernel.
    ref_out, ref_vis = _reference(x, weights, biases, w_vis, l2_scale,
                                  use_l2norm, compute_dtype=jnp.bfloat16)
    assert jnp.allclose(out, ref_out, atol=1e-2, rtol=1e-2), "out mismatch"
    assert jnp.allclose(vis, ref_vis, atol=1e-2, rtol=1e-2), "vis_output mismatch"

    print("KERNEL_OK")
</pallas_src>

<mosaic_0001>
module attributes {stable_mosaic.version = 11 : i64} {
  func.func @kernel(%arg0: i32, %arg1: memref<8x128xbf16, #tpu.memory_space<vmem>>, %arg2: memref<128x128xbf16, #tpu.memory_space<vmem>>, %arg3: memref<1x128xf32, #tpu.memory_space<vmem>>, %arg4: memref<128x128xbf16, #tpu.memory_space<vmem>>, %arg5: memref<1x128xf32, #tpu.memory_space<vmem>>, %arg6: memref<128x128xbf16, #tpu.memory_space<vmem>>, %arg7: memref<1x1xf32, #tpu.memory_space<smem>>, %arg8: memref<8x128xf32, #tpu.memory_space<vmem>>, %arg9: memref<8x128xf32, #tpu.memory_space<vmem>>) attributes {dimension_semantics = [#tpu.dimension_semantics<parallel>], iteration_bounds = array<i64: 1>, scalar_prefetch = 0 : i64, scratch_operands = 0 : i64, tpu.core_type = #tpu.core_type<tc>, window_params = [{transform_indices = @transform_0, window_bounds = array<i64: 8, 128>}, {pipeline_mode = #tpu.pipeline_mode<synchronous>, transform_indices = @transform_1, window_bounds = array<i64: 128, 128>}, {pipeline_mode = #tpu.pipeline_mode<synchronous>, transform_indices = @transform_2, window_bounds = array<i64: 1, 128>}, {pipeline_mode = #tpu.pipeline_mode<synchronous>, transform_indices = @transform_3, window_bounds = array<i64: 128, 128>}, {pipeline_mode = #tpu.pipeline_mode<synchronous>, transform_indices = @transform_4, window_bounds = array<i64: 1, 128>}, {pipeline_mode = #tpu.pipeline_mode<synchronous>, transform_indices = @transform_5, window_bounds = array<i64: 128, 128>}, {transform_indices = @transform_6, window_bounds = array<i64: 1, 1>}, {transform_indices = @transform_7, window_bounds = array<i64: 8, 128>}, {transform_indices = @transform_8, window_bounds = array<i64: 8, 128>}]} {
    %c0 = arith.constant 0 : index
    %c0_0 = arith.constant 0 : index
    %0 = vector.load %arg1[%c0, %c0_0] : memref<8x128xbf16, #tpu.memory_space<vmem>>, vector<8x128xbf16>
    %c0_1 = arith.constant 0 : index
    %c0_2 = arith.constant 0 : index
    %1 = vector.load %arg2[%c0_1, %c0_2] : memref<128x128xbf16, #tpu.memory_space<vmem>>, vector<128x128xbf16>
    %c0_3 = arith.constant 0 : index
    %c0_4 = arith.constant 0 : index
    %2 = vector.load %arg3[%c0_3, %c0_4] : memref<1x128xf32, #tpu.memory_space<vmem>>, vector<1x128xf32>
    %cst = arith.constant dense<0.000000e+00> : vector<8x128xf32>
    %3 = tpu.matmul %0, %1, %cst {dimension_numbers = #tpu.dot_dimension_numbers<[1], [0], [0], [1], [0, 0, 1, 1], [], []>} : vector<8x128xbf16>, vector<128x128xbf16>, vector<8x128xf32> -> vector<8x128xf32>
    %4 = vector.broadcast %2 : vector<1x128xf32> to vector<8x128xf32>
    %5 = arith.addf %3, %4 : vector<8x128xf32>
    %cst_5 = arith.constant 0.000000e+00 : f32
    %6 = vector.broadcast %cst_5 : f32 to vector<8x128xf32>
    %7 = arith.maximumf %5, %6 : vector<8x128xf32>
    %c0_6 = arith.constant 0 : index
    %c0_7 = arith.constant 0 : index
    %8 = vector.load %arg4[%c0_6, %c0_7] : memref<128x128xbf16, #tpu.memory_space<vmem>>, vector<128x128xbf16>
    %c0_8 = arith.constant 0 : index
    %c0_9 = arith.constant 0 : index
    %9 = vector.load %arg5[%c0_8, %c0_9] : memref<1x128xf32, #tpu.memory_space<vmem>>, vector<1x128xf32>
    %10 = arith.truncf %7 : vector<8x128xf32> to vector<8x128xbf16>
    %cst_10 = arith.constant dense<0.000000e+00> : vector<8x128xf32>
    %11 = tpu.matmul %10, %8, %cst_10 {dimension_numbers = #tpu.dot_dimension_numbers<[1], [0], [0], [1], [0, 0, 1, 1], [], []>} : vector<8x128xbf16>, vector<128x128xbf16>, vector<8x128xf32> -> vector<8x128xf32>
    %12 = vector.broadcast %9 : vector<1x128xf32> to vector<8x128xf32>
    %13 = arith.addf %11, %12 : vector<8x128xf32>
    %cst_11 = arith.constant 0.000000e+00 : f32
    %14 = vector.broadcast %cst_11 : f32 to vector<8x128xf32>
    %15 = arith.maximumf %13, %14 : vector<8x128xf32>
    %c0_12 = arith.constant 0 : index
    %c0_13 = arith.constant 0 : index
    %16 = vector.load %arg6[%c0_12, %c0_13] : memref<128x128xbf16, #tpu.memory_space<vmem>>, vector<128x128xbf16>
    %17 = arith.truncf %15 : vector<8x128xf32> to vector<8x128xbf16>
    %cst_14 = arith.constant dense<0.000000e+00> : vector<8x128xf32>
    %18 = tpu.matmul %17, %16, %cst_14 {dimension_numbers = #tpu.dot_dimension_numbers<[1], [0], [0], [1], [0, 0, 1, 1], [], []>} : vector<8x128xbf16>, vector<128x128xbf16>, vector<8x128xf32> -> vector<8x128xf32>
    %c0_15 = arith.constant 0 : index
    %c0_16 = arith.constant 0 : index
    %19 = vector.load %arg9[%c0_15, %c0_16] : memref<8x128xf32, #tpu.memory_space<vmem>>, vector<8x128xf32>
    tpu.vector_store %arg9[%c0_15, %c0_16], %18 {strides = array<i32>} : memref<8x128xf32, #tpu.memory_space<vmem>>, vector<8x128xf32>,
    %c0_17 = arith.constant 0 : index
    %c0_18 = arith.constant 0 : index
    %20 = memref.load %arg7[%c0_17, %c0_18] : memref<1x1xf32, #tpu.memory_space<smem>>
    %21 = arith.mulf %18, %18 : vector<8x128xf32>
    %cst_19 = arith.constant dense<0.000000e+00> : vector<8xf32>
    %22 = vector.multi_reduction <add>, %21, %cst_19 [1] : vector<8x128xf32> to vector<8xf32>
    %23 = vector.shape_cast %22 : vector<8xf32> to vector<8x1xf32>
    %24 = math.rsqrt %23 : vector<8x1xf32>
    %25 = vector.broadcast %20 : f32 to vector<8x1xf32>
    %26 = arith.mulf %24, %25 : vector<8x1xf32>
    %27 = vector.broadcast %26 : vector<8x1xf32> to vector<8x128xf32>
    %28 = arith.mulf %18, %27 : vector<8x128xf32>
    %c0_20 = arith.constant 0 : index
    %c0_21 = arith.constant 0 : index
    %29 = vector.load %arg8[%c0_20, %c0_21] : memref<8x128xf32, #tpu.memory_space<vmem>>, vector<8x128xf32>
    tpu.vector_store %arg8[%c0_20, %c0_21], %28 {strides = array<i32>} : memref<8x128xf32, #tpu.memory_space<vmem>>, vector<8x128xf32>,
    return
  }
  func.func @transform_0(%arg0: i32) -> (i32, i32) {
    %c0_i32 = arith.constant 0 : i32
    %c0_i32_0 = arith.constant 0 : i32
    return %arg0, %c0_i32 : i32, i32
  }
  func.func @transform_1(%arg0: i32) -> (i32, i32) {
    %c0_i32 = arith.constant 0 : i32
    %c0_i32_0 = arith.constant 0 : i32
    %c0_i32_1 = arith.constant 0 : i32
    return %c0_i32, %c0_i32_0 : i32, i32
  }
  func.func @transform_2(%arg0: i32) -> (i32, i32) {
    %c0_i32 = arith.constant 0 : i32
    %c0_i32_0 = arith.constant 0 : i32
    %c0_i32_1 = arith.constant 0 : i32
    return %c0_i32, %c0_i32_0 : i32, i32
  }
  func.func @transform_3(%arg0: i32) -> (i32, i32) {
    %c0_i32 = arith.constant 0 : i32
    %c0_i32_0 = arith.constant 0 : i32
    %c0_i32_1 = arith.constant 0 : i32
    return %c0_i32, %c0_i32_0 : i32, i32
  }
  func.func @transform_4(%arg0: i32) -> (i32, i32) {
    %c0_i32 = arith.constant 0 : i32
    %c0_i32_0 = arith.constant 0 : i32
    %c0_i32_1 = arith.constant 0 : i32
    return %c0_i32, %c0_i32_0 : i32, i32
  }
  func.func @transform_5(%arg0: i32) -> (i32, i32) {
    %c0_i32 = arith.constant 0 : i32
    %c0_i32_0 = arith.constant 0 : i32
    %c0_i32_1 = arith.constant 0 : i32
    return %c0_i32, %c0_i32_0 : i32, i32
  }
  func.func @transform_6(%arg0: i32) -> (i32, i32) {
    %c0_i32 = arith.constant 0 : i32
    %c0_i32_0 = arith.constant 0 : i32
    %c0_i32_1 = arith.constant 0 : i32
    return %c0_i32, %c0_i32_0 : i32, i32
  }
  func.func @transform_7(%arg0: i32) -> (i32, i32) {
    %c0_i32 = arith.constant 0 : i32
    %c0_i32_0 = arith.constant 0 : i32
    return %arg0, %c0_i32 : i32, i32
  }
  func.func @transform_8(%arg0: i32) -> (i32, i32) {
    %c0_i32 = arith.constant 0 : i32
    %c0_i32_0 = arith.constant 0 : i32
    return %arg0, %c0_i32 : i32, i32
  }
}

module attributes {stable_mosaic.version = 11 : i64} {
  func.func @kernel(%arg0: i32, %arg1: memref<8x128xbf16, #tpu.memory_space<vmem>>, %arg2: memref<128x128xbf16, #tpu.memory_space<vmem>>, %arg3: memref<1x128xf32, #tpu.memory_space<vmem>>, %arg4: memref<128x128xbf16, #tpu.memory_space<vmem>>, %arg5: memref<1x128xf32, #tpu.memory_space<vmem>>, %arg6: memref<128x128xbf16, #tpu.memory_space<vmem>>, %arg7: memref<1x1xf32, #tpu.memory_space<smem>>, %arg8: memref<8x128xf32, #tpu.memory_space<vmem>>, %arg9: memref<8x128xf32, #tpu.memory_space<vmem>>) attributes {dimension_semantics = [#tpu.dimension_semantics<parallel>], iteration_bounds = array<i64: 1>, scalar_prefetch = 0 : i64, scratch_operands = 0 : i64, tpu.core_type = #tpu.core_type<tc>, window_params = [{transform_indices = @transform_0, window_bounds = array<i64: 8, 128>}, {pipeline_mode = #tpu.pipeline_mode<synchronous>, transform_indices = @transform_1, window_bounds = array<i64: 128, 128>}, {pipeline_mode = #tpu.pipeline_mode<synchronous>, transform_indices = @transform_2, window_bounds = array<i64: 1, 128>}, {pipeline_mode = #tpu.pipeline_mode<synchronous>, transform_indices = @transform_3, window_bounds = array<i64: 128, 128>}, {pipeline_mode = #tpu.pipeline_mode<synchronous>, transform_indices = @transform_4, window_bounds = array<i64: 1, 128>}, {pipeline_mode = #tpu.pipeline_mode<synchronous>, transform_indices = @transform_5, window_bounds = array<i64: 128, 128>}, {transform_indices = @transform_6, window_bounds = array<i64: 1, 1>}, {transform_indices = @transform_7, window_bounds = array<i64: 8, 128>}, {transform_indices = @transform_8, window_bounds = array<i64: 8, 128>}]} {
    %c0 = arith.constant 0 : index
    %c0_0 = arith.constant 0 : index
    %0 = vector.load %arg1[%c0, %c0_0] : memref<8x128xbf16, #tpu.memory_space<vmem>>, vector<8x128xbf16>
    %c0_1 = arith.constant 0 : index
    %c0_2 = arith.constant 0 : index
    %1 = vector.load %arg2[%c0_1, %c0_2] : memref<128x128xbf16, #tpu.memory_space<vmem>>, vector<128x128xbf16>
    %c0_3 = arith.constant 0 : index
    %c0_4 = arith.constant 0 : index
    %2 = vector.load %arg3[%c0_3, %c0_4] : memref<1x128xf32, #tpu.memory_space<vmem>>, vector<1x128xf32>
    %cst = arith.constant dense<0.000000e+00> : vector<8x128xf32>
    %3 = tpu.matmul %0, %1, %cst {dimension_numbers = #tpu.dot_dimension_numbers<[1], [0], [0], [1], [0, 0, 1, 1], [], []>} : vector<8x128xbf16>, vector<128x128xbf16>, vector<8x128xf32> -> vector<8x128xf32>
    %4 = vector.broadcast %2 : vector<1x128xf32> to vector<8x128xf32>
    %5 = arith.addf %3, %4 : vector<8x128xf32>
    %cst_5 = arith.constant 0.000000e+00 : f32
    %6 = vector.broadcast %cst_5 : f32 to vector<8x128xf32>
    %7 = arith.maximumf %5, %6 : vector<8x128xf32>
    %c0_6 = arith.constant 0 : index
    %c0_7 = arith.constant 0 : index
    %8 = vector.load %arg4[%c0_6, %c0_7] : memref<128x128xbf16, #tpu.memory_space<vmem>>, vector<128x128xbf16>
    %c0_8 = arith.constant 0 : index
    %c0_9 = arith.constant 0 : index
    %9 = vector.load %arg5[%c0_8, %c0_9] : memref<1x128xf32, #tpu.memory_space<vmem>>, vector<1x128xf32>
    %10 = arith.truncf %7 : vector<8x128xf32> to vector<8x128xbf16>
    %cst_10 = arith.constant dense<0.000000e+00> : vector<8x128xf32>
    %11 = tpu.matmul %10, %8, %cst_10 {dimension_numbers = #tpu.dot_dimension_numbers<[1], [0], [0], [1], [0, 0, 1, 1], [], []>} : vector<8x128xbf16>, vector<128x128xbf16>, vector<8x128xf32> -> vector<8x128xf32>
    %12 = vector.broadcast %9 : vector<1x128xf32> to vector<8x128xf32>
    %13 = arith.addf %11, %12 : vector<8x128xf32>
    %cst_11 = arith.constant 0.000000e+00 : f32
    %14 = vector.broadcast %cst_11 : f32 to vector<8x128xf32>
    %15 = arith.maximumf %13, %14 : vector<8x128xf32>
    %c0_12 = arith.constant 0 : index
    %c0_13 = arith.constant 0 : index
    %16 = vector.load %arg6[%c0_12, %c0_13] : memref<128x128xbf16, #tpu.memory_space<vmem>>, vector<128x128xbf16>
    %17 = arith.truncf %15 : vector<8x128xf32> to vector<8x128xbf16>
    %cst_14 = arith.constant dense<0.000000e+00> : vector<8x128xf32>
    %18 = tpu.matmul %17, %16, %cst_14 {dimension_numbers = #tpu.dot_dimension_numbers<[1], [0], [0], [1], [0, 0, 1, 1], [], []>} : vector<8x128xbf16>, vector<128x128xbf16>, vector<8x128xf32> -> vector<8x128xf32>
    %c0_15 = arith.constant 0 : index
    %c0_16 = arith.constant 0 : index
    %19 = vector.load %arg9[%c0_15, %c0_16] : memref<8x128xf32, #tpu.memory_space<vmem>>, vector<8x128xf32>
    tpu.vector_store %arg9[%c0_15, %c0_16], %18 {strides = array<i32>} : memref<8x128xf32, #tpu.memory_space<vmem>>, vector<8x128xf32>,
    %c0_17 = arith.constant 0 : index
    %c0_18 = arith.constant 0 : index
    %20 = memref.load %arg7[%c0_17, %c0_18] : memref<1x1xf32, #tpu.memory_space<smem>>
    %21 = arith.mulf %18, %18 : vector<8x128xf32>
    %cst_19 = arith.constant dense<0.000000e+00> : vector<8xf32>
    %22 = vector.multi_reduction <add>, %21, %cst_19 [1] : vector<8x128xf32> to vector<8xf32>
    %23 = vector.shape_cast %22 : vector<8xf32> to vector<8x1xf32>
    %24 = math.rsqrt %23 : vector<8x1xf32>
    %25 = vector.broadcast %20 : f32 to vector<8x1xf32>
    %26 = arith.mulf %24, %25 : vector<8x1xf32>
    %27 = vector.broadcast %26 : vector<8x1xf32> to vector<8x128xf32>
    %28 = arith.mulf %18, %27 : vector<8x128xf32>
    %c0_20 = arith.constant 0 : index
    %c0_21 = arith.constant 0 : index
    %29 = vector.load %arg8[%c0_20, %c0_21] : memref<8x128xf32, #tpu.memory_space<vmem>>, vector<8x128xf32>
    tpu.vector_store %arg8[%c0_20, %c0_21], %28 {strides = array<i32>} : memref<8x128xf32, #tpu.memory_space<vmem>>, vector<8x128xf32>,
    return
  }
  func.func @transform_0(%arg0: i32) -> (i32, i32) {
    %c0_i32 = arith.constant 0 : i32
    %c0_i32_0 = arith.constant 0 : i32
    return %arg0, %c0_i32 : i32, i32
  }
  func.func @transform_1(%arg0: i32) -> (i32, i32) {
    %c0_i32 = arith.constant 0 : i32
    %c0_i32_0 = arith.constant 0 : i32
    %c0_i32_1 = arith.constant 0 : i32
    return %c0_i32, %c0_i32_0 : i32, i32
  }
  func.func @transform_2(%arg0: i32) -> (i32, i32) {
    %c0_i32 = arith.constant 0 : i32
    %c0_i32_0 = arith.constant 0 : i32
    %c0_i32_1 = arith.constant 0 : i32
    return %c0_i32, %c0_i32_0 : i32, i32
  }
  func.func @transform_3(%arg0: i32) -> (i32, i32) {
    %c0_i32 = arith.constant 0 : i32
    %c0_i32_0 = arith.constant 0 : i32
    %c0_i32_1 = arith.constant 0 : i32
    return %c0_i32, %c0_i32_0 : i32, i32
  }
  func.func @transform_4(%arg0: i32) -> (i32, i32) {
    %c0_i32 = arith.constant 0 : i32
    %c0_i32_0 = arith.constant 0 : i32
    %c0_i32_1 = arith.constant 0 : i32
    return %c0_i32, %c0_i32_0 : i32, i32
  }
  func.func @transform_5(%arg0: i32) -> (i32, i32) {
    %c0_i32 = arith.constant 0 : i32
    %c0_i32_0 = arith.constant 0 : i32
    %c0_i32_1 = arith.constant 0 : i32
    return %c0_i32, %c0_i32_0 : i32, i32
  }
  func.func @transform_6(%arg0: i32) -> (i32, i32) {
    %c0_i32 = arith.constant 0 : i32
    %c0_i32_0 = arith.constant 0 : i32
    %c0_i32_1 = arith.constant 0 : i32
    return %c0_i32, %c0_i32_0 : i32, i32
  }
  func.func @transform_7(%arg0: i32) -> (i32, i32) {
    %c0_i32 = arith.constant 0 : i32
    %c0_i32_0 = arith.constant 0 : i32
    return %arg0, %c0_i32 : i32, i32
  }
  func.func @transform_8(%arg0: i32) -> (i32, i32) {
    %c0_i32 = arith.constant 0 : i32
    %c0_i32_0 = arith.constant 0 : i32
    return %arg0, %c0_i32 : i32, i32
  }
}

</mosaic_0001>

<llo_original>
// kernel: tpu_custom_call.1
$region0: #{tpu_custom_call.1}
  #allocation0 [shape = 'u32[]', space=smem, size = 0x4, offset = 0x4, fixed_abs, tag = 'smem constant byte address 0x4 - core index']
  #allocation1 [shape = 'u32[144,128]{1,0:T(1,128)}', space=vmem, size = 0x12000, scoped, tag = 'internal scratch']
  #allocation2 [shape = 'f32[1,1]{1,0:T(1,128)S(6)}', space=smem, size = 0x200, scoped, tag = 'scoped memory for tpu_custom_call.1']
  %s0 = inlined_call_operand.hbm [shape: bf16[8,128], index: 0, kind: input, shape index: {}]
  %s1 = inlined_call_operand.hbm [shape: bf16[128,128], index: 1, kind: input, shape index: {}]
  %s2 = inlined_call_operand.vmem [shape: f32[1,128], index: 2, kind: input, shape index: {}]
  %s3 = inlined_call_operand.hbm [shape: bf16[128,128], index: 3, kind: input, shape index: {}]
  %s4 = inlined_call_operand.vmem [shape: f32[1,128], index: 4, kind: input, shape index: {}]
  %s5 = inlined_call_operand.hbm [shape: bf16[128,128], index: 5, kind: input, shape index: {}]
  %s6 = inlined_call_operand.<no memory space> [shape: f32[1,1], index: 6, kind: input, shape index: {}]
  %s7 = inlined_call_operand.hbm [shape: f32[8,128], index: 7, kind: output, shape index: {0}]
  %s8 = inlined_call_operand.hbm [shape: f32[8,128], index: 8, kind: output, shape index: {1}]
  %9 = xla_tuple %s7, %s8
  %s10 = sld [smem:[#allocation0]]
  $region62: #{tpu_custom_call.1} parent=0
    _
  %s12 = ssub.s32 1, %s10
  %s13 = scalar_select 0, %s12, %s10
  %14 = sst [smem:[#allocation2]] %s6
  $region1: #{tpu_custom_call.1} parent=0
    #allocation3 [shape = 'u8[2048]{0}', space=vmem, size = 0x800, scoped, tag = 'input window, operand 0, single buffered']
    #allocation4 [shape = 's32[1]{0}', space=sflag, size = 0x4, scoped, tag = 'scoped memory for tpu_custom_call.1']
    #allocation5 [shape = 's32[1]{0}', space=sflag, size = 0x4, scoped, tag = 'scoped memory for tpu_custom_call.1']
    #allocation6 [shape = 'u8[32768]{0}', space=vmem, size = 0x8000, scoped, tag = 'input window, operand 1, single buffered']
    #allocation7 [shape = 's32[1]{0}', space=sflag, size = 0x4, scoped, tag = 'scoped memory for tpu_custom_call.1']
    #allocation8 [shape = 'u8[32768]{0}', space=vmem, size = 0x8000, scoped, tag = 'input window, operand 3, single buffered']
    #allocation9 [shape = 'u8[32768]{0}', space=vmem, size = 0x8000, scoped, tag = 'input window, operand 5, single buffered']
    #allocation10 [shape = 's32[1]{0}', space=sflag, size = 0x4, scoped, tag = 'scoped memory for tpu_custom_call.1']
    #allocation11 [shape = 'u8[4096]{0}', space=vmem, size = 0x1000, scoped, tag = 'output window, operand 0, single buffered']
    #allocation12 [shape = 'u8[4096]{0}', space=vmem, size = 0x1000, scoped, tag = 'output window, operand 1, single buffered']
    #allocation13 [shape = 's32[1]{0}', space=sflag, size = 0x4, scoped, tag = 'scoped memory for tpu_custom_call.1']
    %15 = vsyncpa [#allocation4], 0
    %16 = vsyncpa [#allocation7], 0
    %17 = vsyncpa [#allocation10], 0
    %18 = vsyncpa [#allocation5], 0
    %19 = vsyncpa [#allocation13], 0
    // Predicated region
    $region2: #{tpu_custom_call.1} parent=1 // pred_check
      _
    $region3: #{tpu_custom_call.1} parent=1 // pred_check_branch
      %21 = sbr.rel (0) target = $region5
    $region4: #{tpu_custom_call.1} parent=1 // pred_region
      %s23 = ssub.s32 64, 64
      %24 = vsyncadd [#allocation4], %s23
      %s26 = sshll.u32 [#allocation3], 4
      %s27 = int_to_ptr.vmem [resolvable:$true] %s26
      %29 = dma.hbm_to_vmem [thread:$0]  %s0, 64, %s27, [#allocation4]
    $region5: #{tpu_custom_call.1} parent=1 // pred_fallthru
      _
    // Predicated region
    $region6: #{tpu_custom_call.1} parent=1 // pred_check
      _
    $region7: #{tpu_custom_call.1} parent=1 // pred_check_branch
      %31 = sbr.rel (0) target = $region9
    $region8: #{tpu_custom_call.1} parent=1 // pred_region
      %s33 = ssub.s32 1024, 1024
      %34 = vsyncadd [#allocation7], %s33
      %s35 = sshll.u32 [#allocation6], 4
      %s36 = int_to_ptr.vmem [resolvable:$true] %s35
      %41 = dma.hbm_to_vmem [thread:$0]  %s1, 1024, %s36, [#allocation7], 64, 64, 4
    $region9: #{tpu_custom_call.1} parent=1 // pred_fallthru
      _
    // Predicated region
    $region10: #{tpu_custom_call.1} parent=1 // pred_check
      _
    $region11: #{tpu_custom_call.1} parent=1 // pred_check_branch
      %43 = sbr.rel (0) target = $region13
    $region12: #{tpu_custom_call.1} parent=1 // pred_region
      _
    $region13: #{tpu_custom_call.1} parent=1 // pred_fallthru
      _
    // Predicated region
    $region14: #{tpu_custom_call.1} parent=1 // pred_check
      _
    $region15: #{tpu_custom_call.1} parent=1 // pred_check_branch
      %45 = sbr.rel (0) target = $region17
    $region16: #{tpu_custom_call.1} parent=1 // pred_region
      %s47 = ssub.s32 1024, 1024
      %48 = vsyncadd [#allocation7], %s47
      %s49 = sshll.u32 [#allocation8], 4
      %s50 = int_to_ptr.vmem [resolvable:$true] %s49
      %55 = dma.hbm_to_vmem [thread:$0]  %s3, 1024, %s50, [#allocation7], 64, 64, 4
    $region17: #{tpu_custom_call.1} parent=1 // pred_fallthru
      _
    // Predicated region
    $region18: #{tpu_custom_call.1} parent=1 // pred_check
      _
    $region19: #{tpu_custom_call.1} parent=1 // pred_check_branch
      %57 = sbr.rel (0) target = $region21
    $region20: #{tpu_custom_call.1} parent=1 // pred_region
      _
    $region21: #{tpu_custom_call.1} parent=1 // pred_fallthru
      _
    // Predicated region
    $region22: #{tpu_custom_call.1} parent=1 // pred_check
      _
    $region23: #{tpu_custom_call.1} parent=1 // pred_check_branch
      %59 = sbr.rel (0) target = $region25
    $region24: #{tpu_custom_call.1} parent=1 // pred_region
      %s61 = ssub.s32 1024, 1024
      %62 = vsyncadd [#allocation10], %s61
      %s63 = sshll.u32 [#allocation9], 4
      %s64 = int_to_ptr.vmem [resolvable:$true] %s63
      %69 = dma.hbm_to_vmem [thread:$0]  %s5, 1024, %s64, [#allocation10], 64, 64, 4
    $region25: #{tpu_custom_call.1} parent=1 // pred_fallthru
      _
    // Predicated region
    $region26: #{tpu_custom_call.1} parent=1 // pred_check
      _
    $region27: #{tpu_custom_call.1} parent=1 // pred_check_branch
      %71 = sbr.rel (0) target = $region29
    $region28: #{tpu_custom_call.1} parent=1 // pred_region
      _
    $region29: #{tpu_custom_call.1} parent=1 // pred_fallthru
      _
    // Predicated region
    $region30: #{tpu_custom_call.1} parent=1 // pred_check
      _
    $region31: #{tpu_custom_call.1} parent=1 // pred_check_branch
      %73 = sbr.rel (0) target = $region33
    $region32: #{tpu_custom_call.1} parent=1 // pred_region
      %74 = dma.done [#allocation4], 64
    $region33: #{tpu_custom_call.1} parent=1 // pred_fallthru
      _
    // Predicated region
    $region34: #{tpu_custom_call.1} parent=1 // pred_check
      _
    $region35: #{tpu_custom_call.1} parent=1 // pred_check_branch
      %76 = sbr.rel (0) target = $region37
    $region36: #{tpu_custom_call.1} parent=1 // pred_region
      %77 = dma.done [#allocation7], 1024
    $region37: #{tpu_custom_call.1} parent=1 // pred_fallthru
      _
    // Predicated region
    $region38: #{tpu_custom_call.1} parent=1 // pred_check
      _
    $region39: #{tpu_custom_call.1} parent=1 // pred_check_branch
      %79 = sbr.rel (0) target = $region41
    $region40: #{tpu_custom_call.1} parent=1 // pred_region
      %80 = dma.done [#allocation7], 1024
    $region41: #{tpu_custom_call.1} parent=1 // pred_fallthru
      _
    // Predicated region
    $region42: #{tpu_custom_call.1} parent=1 // pred_check
      _
    $region43: #{tpu_custom_call.1} parent=1 // pred_check_branch
      %82 = sbr.rel (0) target = $region45
    $region44: #{tpu_custom_call.1} parent=1 // pred_region
      %83 = dma.done [#allocation10], 1024
    $region45: #{tpu_custom_call.1} parent=1 // pred_fallthru
      _
    %v85 = vld [vmem:[#allocation3] sm:$0xf]
    %v86 = vld [vmem:[#allocation6] sm:$0xf]
    %v87 = vld [vmem:[#allocation6 + $0x4] sm:$0xf]
    %v88 = vld [vmem:[#allocation6 + $0x8] sm:$0xf]
    %v89 = vld [vmem:[#allocation6 + $0xc] sm:$0xf]
    %v90 = vld [vmem:[#allocation6 + $0x10] sm:$0xf]
    %v91 = vld [vmem:[#allocation6 + $0x14] sm:$0xf]
    %v92 = vld [vmem:[#allocation6 + $0x18] sm:$0xf]
    %v93 = vld [vmem:[#allocation6 + $0x1c] sm:$0xf]
    %v94 = vld [vmem:[#allocation6 + $0x20] sm:$0xf]
    %v95 = vld [vmem:[#allocation6 + $0x24] sm:$0xf]
    %v96 = vld [vmem:[#allocation6 + $0x28] sm:$0xf]
    %v97 = vld [vmem:[#allocation6 + $0x2c] sm:$0xf]
    %v98 = vld [vmem:[#allocation6 + $0x30] sm:$0xf]
    %v99 = vld [vmem:[#allocation6 + $0x34] sm:$0xf]
    %v100 = vld [vmem:[#allocation6 + $0x38] sm:$0xf]
    %v101 = vld [vmem:[#allocation6 + $0x3c] sm:$0xf]
    %v102 = vld [vmem:[%s2] sm:$0x1]
    %v104 = vlaneseq
    %v105 = vshrl.u32 %v104, 7
    %v106 = vsub.s32 0, %v105
    %v107 = vrot.slane %v102, %v106
    %v125 = vunpack.c.l.b16 %v86
    %v126 = vunpack.c.l.b16 %v87
    %v127 = vunpack.c.l.b16 %v88
    %v128 = vunpack.c.l.b16 %v89
    %v129 = vunpack.c.l.b16 %v90
    %v130 = vunpack.c.l.b16 %v91
    %v131 = vunpack.c.l.b16 %v92
    %v132 = vunpack.c.l.b16 %v93
    %v133 = vunpack.c.l.b16 %v94
    %v134 = vunpack.c.l.b16 %v95
    %v135 = vunpack.c.l.b16 %v96
    %v136 = vunpack.c.l.b16 %v97
    %v137 = vunpack.c.l.b16 %v98
    %v138 = vunpack.c.l.b16 %v99
    %v139 = vunpack.c.l.b16 %v100
    %v140 = vunpack.c.l.b16 %v101
    %v141 = vpack.c.b16 %v126, %v125
    %v142 = vpack.c.b16 %v128, %v127
    %v143 = vpack.c.b16 %v130, %v129
    %v144 = vpack.c.b16 %v132, %v131
    %v145 = vpack.c.b16 %v134, %v133
    %v146 = vpack.c.b16 %v136, %v135
    %v147 = vpack.c.b16 %v138, %v137
    %v148 = vpack.c.b16 %v140, %v139
    %157 = vmatprep.subr.bf16.mxu0 0
    %158 = vmatpush1.bf16.msra.mxu0 %v141
    %159 = vmatprep.subr.bf16.mxu0 0
    %160 = vmatpush1.bf16.msra.mxu0 %v142
    %161 = vmatprep.subr.bf16.mxu0 0
    %162 = vmatpush1.bf16.msra.mxu0 %v143
    %163 = vmatprep.subr.bf16.mxu0 0
    %164 = vmatpush1.bf16.msra.mxu0 %v144
    %165 = vmatprep.subr.bf16.mxu0 0
    %166 = vmatpush1.bf16.msra.mxu0 %v145
    %167 = vmatprep.subr.bf16.mxu0 0
    %168 = vmatpush1.bf16.msra.mxu0 %v146
    %169 = vmatprep.subr.bf16.mxu0 0
    %170 = vmatpush1.bf16.msra.mxu0 %v147
    %171 = vmatprep.subr.bf16.mxu0 0
    %172 = vmatpush1.bf16.msra.mxu0 %v148
    %173 = vmatprep.subr.bf16.mxu0 0
    %174 = vmatpush1.bf16.msra.mxu0 0
    %175 = vmatprep.subr.bf16.mxu0 0
    %176 = vmatpush1.bf16.msra.mxu0 0
    %177 = vmatprep.subr.bf16.mxu0 0
    %178 = vmatpush1.bf16.msra.mxu0 0
    %179 = vmatprep.subr.bf16.mxu0 0
    %180 = vmatpush1.bf16.msra.mxu0 0
    %181 = vmatprep.subr.bf16.mxu0 0
    %182 = vmatpush1.bf16.msra.mxu0 0
    %183 = vmatprep.subr.bf16.mxu0 0
    %184 = vmatpush1.bf16.msra.mxu0 0
    %185 = vmatprep.subr.bf16.mxu0 0
    %186 = vmatpush1.bf16.msra.mxu0 0
    %187 = vmatprep.subr.bf16.mxu0 0
    %188 = vmatpush1.bf16.msra.mxu0 0
    %189 = vmatprep.mubr.bf16.mxu0 0
    %190 = vmatmul.mubr.bf16.gmra.mrb[0].mxu0 %v85
    %v191 = vpop.f32.mrb[0].mxu0
    %v192 = vadd.f32 %v107, %v191
    %v193 = vpop.f32.mrb[0].mxu0
    %v194 = vpop.f32.mrb[0].mxu0
    %v195 = vpop.f32.mrb[0].mxu0
    %196 = vdwg.mxu0
    %v197 = vmax.f32 %v192, 0.0
    %v198 = vld [vmem:[#allocation8] sm:$0xf]
    %v199 = vld [vmem:[#allocation8 + $0x4] sm:$0xf]
    %v200 = vld [vmem:[#allocation8 + $0x8] sm:$0xf]
    %v201 = vld [vmem:[#allocation8 + $0xc] sm:$0xf]
    %v202 = vld [vmem:[#allocation8 + $0x10] sm:$0xf]
    %v203 = vld [vmem:[#allocation8 + $0x14] sm:$0xf]
    %v204 = vld [vmem:[#allocation8 + $0x18] sm:$0xf]
    %v205 = vld [vmem:[#allocation8 + $0x1c] sm:$0xf]
    %v206 = vld [vmem:[#allocation8 + $0x20] sm:$0xf]
    %v207 = vld [vmem:[#allocation8 + $0x24] sm:$0xf]
    %v208 = vld [vmem:[#allocation8 + $0x28] sm:$0xf]
    %v209 = vld [vmem:[#allocation8 + $0x2c] sm:$0xf]
    %v210 = vld [vmem:[#allocation8 + $0x30] sm:$0xf]
    %v211 = vld [vmem:[#allocation8 + $0x34] sm:$0xf]
    %v212 = vld [vmem:[#allocation8 + $0x38] sm:$0xf]
    %v213 = vld [vmem:[#allocation8 + $0x3c] sm:$0xf]
    %v214 = vld [vmem:[%s4] sm:$0x1]
    %v215 = vpack.c.bf16 %v197, %v197
    %v217 = vlaneseq
    %v218 = vshrl.u32 %v217, 7
    %v219 = vsub.s32 0, %v218
    %v220 = vrot.slane %v214, %v219
    %v238 = vunpack.c.l.b16 %v198
    %v239 = vunpack.c.l.b16 %v199
    %v240 = vunpack.c.l.b16 %v200
    %v241 = vunpack.c.l.b16 %v201
    %v242 = vunpack.c.l.b16 %v202
    %v243 = vunpack.c.l.b16 %v203
    %v244 = vunpack.c.l.b16 %v204
    %v245 = vunpack.c.l.b16 %v205
    %v246 = vunpack.c.l.b16 %v206
    %v247 = vunpack.c.l.b16 %v207
    %v248 = vunpack.c.l.b16 %v208
    %v249 = vunpack.c.l.b16 %v209
    %v250 = vunpack.c.l.b16 %v210
    %v251 = vunpack.c.l.b16 %v211
    %v252 = vunpack.c.l.b16 %v212
    %v253 = vunpack.c.l.b16 %v213
    %v254 = vpack.c.b16 %v239, %v238
    %v255 = vpack.c.b16 %v241, %v240
    %v256 = vpack.c.b16 %v243, %v242
    %v257 = vpack.c.b16 %v245, %v244
    %v258 = vpack.c.b16 %v247, %v246
    %v259 = vpack.c.b16 %v249, %v248
    %v260 = vpack.c.b16 %v251, %v250
    %v261 = vpack.c.b16 %v253, %v252
    %270 = vmatprep.subr.bf16.mxu0 0
    %271 = vmatpush1.bf16.msra.mxu0 %v254
    %272 = vmatprep.subr.bf16.mxu0 0
    %273 = vmatpush1.bf16.msra.mxu0 %v255
    %274 = vmatprep.subr.bf16.mxu0 0
    %275 = vmatpush1.bf16.msra.mxu0 %v256
    %276 = vmatprep.subr.bf16.mxu0 0
    %277 = vmatpush1.bf16.msra.mxu0 %v257
    %278 = vmatprep.subr.bf16.mxu0 0
    %279 = vmatpush1.bf16.msra.mxu0 %v258
    %280 = vmatprep.subr.bf16.mxu0 0
    %281 = vmatpush1.bf16.msra.mxu0 %v259
    %282 = vmatprep.subr.bf16.mxu0 0
    %283 = vmatpush1.bf16.msra.mxu0 %v260
    %284 = vmatprep.subr.bf16.mxu0 0
    %285 = vmatpush1.bf16.msra.mxu0 %v261
    %286 = vmatprep.subr.bf16.mxu0 0
    %287 = vmatpush1.bf16.msra.mxu0 0
    %288 = vmatprep.subr.bf16.mxu0 0
    %289 = vmatpush1.bf16.msra.mxu0 0
    %290 = vmatprep.subr.bf16.mxu0 0
    %291 = vmatpush1.bf16.msra.mxu0 0
    %292 = vmatprep.subr.bf16.mxu0 0
    %293 = vmatpush1.bf16.msra.mxu0 0
    %294 = vmatprep.subr.bf16.mxu0 0
    %295 = vmatpush1.bf16.msra.mxu0 0
    %296 = vmatprep.subr.bf16.mxu0 0
    %297 = vmatpush1.bf16.msra.mxu0 0
    %298 = vmatprep.subr.bf16.mxu0 0
    %299 = vmatpush1.bf16.msra.mxu0 0
    %300 = vmatprep.subr.bf16.mxu0 0
    %301 = vmatpush1.bf16.msra.mxu0 0
    %302 = vmatprep.mubr.bf16.mxu0 0
    %303 = vmatmul.mubr.bf16.gmra.mrb[0].mxu0 %v215
    %v304 = vpop.f32.mrb[0].mxu0
    %v305 = vadd.f32 %v220, %v304
    %v306 = vpop.f32.mrb[0].mxu0
    %v307 = vpop.f32.mrb[0].mxu0
    %v308 = vpop.f32.mrb[0].mxu0
    %309 = vdwg.mxu0
    %v310 = vmax.f32 %v305, 0.0
    %v311 = vld [vmem:[#allocation9] sm:$0xf]
    %v312 = vld [vmem:[#allocation9 + $0x4] sm:$0xf]
    %v313 = vld [vmem:[#allocation9 + $0x8] sm:$0xf]
    %v314 = vld [vmem:[#allocation9 + $0xc] sm:$0xf]
    %v315 = vld [vmem:[#allocation9 + $0x10] sm:$0xf]
    %v316 = vld [vmem:[#allocation9 + $0x14] sm:$0xf]
    %v317 = vld [vmem:[#allocation9 + $0x18] sm:$0xf]
    %v318 = vld [vmem:[#allocation9 + $0x1c] sm:$0xf]
    %v319 = vld [vmem:[#allocation9 + $0x20] sm:$0xf]
    %v320 = vld [vmem:[#allocation9 + $0x24] sm:$0xf]
    %v321 = vld [vmem:[#allocation9 + $0x28] sm:$0xf]
    %v322 = vld [vmem:[#allocation9 + $0x2c] sm:$0xf]
    %v323 = vld [vmem:[#allocation9 + $0x30] sm:$0xf]
    %v324 = vld [vmem:[#allocation9 + $0x34] sm:$0xf]
    %v325 = vld [vmem:[#allocation9 + $0x38] sm:$0xf]
    %v326 = vld [vmem:[#allocation9 + $0x3c] sm:$0xf]
    %v327 = vpack.c.bf16 %v310, %v310
    %v344 = vunpack.c.l.b16 %v311
    %v345 = vunpack.c.l.b16 %v312
    %v346 = vunpack.c.l.b16 %v313
    %v347 = vunpack.c.l.b16 %v314
    %v348 = vunpack.c.l.b16 %v315
    %v349 = vunpack.c.l.b16 %v316
    %v350 = vunpack.c.l.b16 %v317
    %v351 = vunpack.c.l.b16 %v318
    %v352 = vunpack.c.l.b16 %v319
    %v353 = vunpack.c.l.b16 %v320
    %v354 = vunpack.c.l.b16 %v321
    %v355 = vunpack.c.l.b16 %v322
    %v356 = vunpack.c.l.b16 %v323
    %v357 = vunpack.c.l.b16 %v324
    %v358 = vunpack.c.l.b16 %v325
    %v359 = vunpack.c.l.b16 %v326
    %v360 = vpack.c.b16 %v345, %v344
    %v361 = vpack.c.b16 %v347, %v346
    %v362 = vpack.c.b16 %v349, %v348
    %v363 = vpack.c.b16 %v351, %v350
    %v364 = vpack.c.b16 %v353, %v352
    %v365 = vpack.c.b16 %v355, %v354
    %v366 = vpack.c.b16 %v357, %v356
    %v367 = vpack.c.b16 %v359, %v358
    %376 = vmatprep.subr.bf16.mxu0 0
    %377 = vmatpush1.bf16.msra.mxu0 %v360
    %378 = vmatprep.subr.bf16.mxu0 0
    %379 = vmatpush1.bf16.msra.mxu0 %v361
    %380 = vmatprep.subr.bf16.mxu0 0
    %381 = vmatpush1.bf16.msra.mxu0 %v362
    %382 = vmatprep.subr.bf16.mxu0 0
    %383 = vmatpush1.bf16.msra.mxu0 %v363
    %384 = vmatprep.subr.bf16.mxu0 0
    %385 = vmatpush1.bf16.msra.mxu0 %v364
    %386 = vmatprep.subr.bf16.mxu0 0
    %387 = vmatpush1.bf16.msra.mxu0 %v365
    %388 = vmatprep.subr.bf16.mxu0 0
    %389 = vmatpush1.bf16.msra.mxu0 %v366
    %390 = vmatprep.subr.bf16.mxu0 0
    %391 = vmatpush1.bf16.msra.mxu0 %v367
    %392 = vmatprep.subr.bf16.mxu0 0
    %393 = vmatpush1.bf16.msra.mxu0 0
    %394 = vmatprep.subr.bf16.mxu0 0
    %395 = vmatpush1.bf16.msra.mxu0 0
    %396 = vmatprep.subr.bf16.mxu0 0
    %397 = vmatpush1.bf16.msra.mxu0 0
    %398 = vmatprep.subr.bf16.mxu0 0
    %399 = vmatpush1.bf16.msra.mxu0 0
    %400 = vmatprep.subr.bf16.mxu0 0
    %401 = vmatpush1.bf16.msra.mxu0 0
    %402 = vmatprep.subr.bf16.mxu0 0
    %403 = vmatpush1.bf16.msra.mxu0 0
    %404 = vmatprep.subr.bf16.mxu0 0
    %405 = vmatpush1.bf16.msra.mxu0 0
    %406 = vmatprep.subr.bf16.mxu0 0
    %407 = vmatpush1.bf16.msra.mxu0 0
    %408 = vmatprep.mubr.bf16.mxu0 0
    %409 = vmatmul.mubr.bf16.gmra.mrb[0].mxu0 %v327
    %v410 = vpop.f32.mrb[0].mxu0
    %v411 = vadd.f32 0.0, %v410
    %v412 = vpop.f32.mrb[0].mxu0
    %v413 = vpop.f32.mrb[0].mxu0
    %v414 = vpop.f32.mrb[0].mxu0
    %415 = vdwg.mxu0
    %416 = vst [vmem:[#allocation12] sm:$0xff] %v411
    %s417 = sld [smem:[#allocation2]]
    %v418 = vmul.f32 %v411, %v411
    %419 = vadd.xlane.f32.xlu0 %v418
    %v420 = vpop.xlane.xlu0 %419
    %v421 = vrsqrt.pop %v420
    %v422 = vstv %s417
    %v423 = vmul.f32 %v421, %v422
    %v424 = vmul.f32 %v411, %v423
    %425 = vst [vmem:[#allocation11] sm:$0xff] %v424
    // Predicated region
    $region46: #{tpu_custom_call.1} parent=1 // pred_check
      _
    $region47: #{tpu_custom_call.1} parent=1 // pred_check_branch
      %427 = sbr.rel (0) target = $region49
    $region48: #{tpu_custom_call.1} parent=1 // pred_region
      %s429 = ssub.s32 128, 128
      %430 = vsyncadd [#allocation5], %s429
      %s432 = sshll.u32 [#allocation11], 4
      %s433 = int_to_ptr.vmem [resolvable:$true] %s432
      %435 = dma.vmem_to_hbm [thread:$0]  %s433, 128, %s7, [#allocation5]
    $region49: #{tpu_custom_call.1} parent=1 // pred_fallthru
      _
    // Predicated region
    $region50: #{tpu_custom_call.1} parent=1 // pred_check
      _
    $region51: #{tpu_custom_call.1} parent=1 // pred_check_branch
      %437 = sbr.rel (0) target = $region53
    $region52: #{tpu_custom_call.1} parent=1 // pred_region
      %s439 = ssub.s32 128, 128
      %440 = vsyncadd [#allocation13], %s439
      %s442 = sshll.u32 [#allocation12], 4
      %s443 = int_to_ptr.vmem [resolvable:$true] %s442
      %445 = dma.vmem_to_hbm [thread:$0]  %s443, 128, %s8, [#allocation13]
    $region53: #{tpu_custom_call.1} parent=1 // pred_fallthru
      _
    // Predicated region
    $region54: #{tpu_custom_call.1} parent=1 // pred_check
      _
    $region55: #{tpu_custom_call.1} parent=1 // pred_check_branch
      %447 = sbr.rel (0) target = $region57
    $region56: #{tpu_custom_call.1} parent=1 // pred_region
      %448 = dma.done [#allocation5], 128
    $region57: #{tpu_custom_call.1} parent=1 // pred_fallthru
      _
    // Predicated region
    $region58: #{tpu_custom_call.1} parent=1 // pred_check
      _
    $region59: #{tpu_custom_call.1} parent=1 // pred_check_branch
      %450 = sbr.rel (0) target = $region61
    $region60: #{tpu_custom_call.1} parent=1 // pred_region
      %451 = dma.done [#allocation13], 128
    $region61: #{tpu_custom_call.1} parent=1 // pred_fallthru
      _
    %452 = vsyncpa [#allocation4], 1
    %453 = vsyncpa [#allocation7], 1
    %454 = vsyncpa [#allocation10], 1
    %455 = vsyncpa [#allocation5], 1
    %456 = vsyncpa [#allocation13], 1

// kernel: tpu_custom_call.1
$region0: #{tpu_custom_call.1}
  #allocation0 [shape = 'u32[]', space=smem, size = 0x4, offset = 0x4, fixed_abs, tag = 'smem constant byte address 0x4 - core index']
  #allocation1 [shape = 'u32[144,128]{1,0:T(1,128)}', space=vmem, size = 0x12000, scoped, tag = 'internal scratch']
  #allocation2 [shape = 'f32[1,1]{1,0:T(1,128)S(6)}', space=smem, size = 0x200, scoped, tag = 'scoped memory for tpu_custom_call.1']
  %s0 = inlined_call_operand.hbm [shape: bf16[8,128], index: 0, kind: input, shape index: {}]
  %s1 = inlined_call_operand.hbm [shape: bf16[128,128], index: 1, kind: input, shape index: {}]
  %s2 = inlined_call_operand.vmem [shape: f32[1,128], index: 2, kind: input, shape index: {}]
  %s3 = inlined_call_operand.hbm [shape: bf16[128,128], index: 3, kind: input, shape index: {}]
  %s4 = inlined_call_operand.vmem [shape: f32[1,128], index: 4, kind: input, shape index: {}]
  %s5 = inlined_call_operand.hbm [shape: bf16[128,128], index: 5, kind: input, shape index: {}]
  %s6 = inlined_call_operand.<no memory space> [shape: f32[1,1], index: 6, kind: input, shape index: {}]
  %s7 = inlined_call_operand.hbm [shape: f32[8,128], index: 7, kind: output, shape index: {0}]
  %s8 = inlined_call_operand.hbm [shape: f32[8,128], index: 8, kind: output, shape index: {1}]
  %9 = xla_tuple %s7, %s8
  %s10 = sld [smem:[#allocation0]]
  $region62: #{tpu_custom_call.1} parent=0
    _
  %s12 = ssub.s32 1, %s10
  %s13 = scalar_select 0, %s12, %s10
  %14 = sst [smem:[#allocation2]] %s6
  $region1: #{tpu_custom_call.1} parent=0
    #allocation3 [shape = 'u8[2048]{0}', space=vmem, size = 0x800, scoped, tag = 'input window, operand 0, single buffered']
    #allocation4 [shape = 's32[1]{0}', space=sflag, size = 0x4, scoped, tag = 'scoped memory for tpu_custom_call.1']
    #allocation5 [shape = 's32[1]{0}', space=sflag, size = 0x4, scoped, tag = 'scoped memory for tpu_custom_call.1']
    #allocation6 [shape = 'u8[32768]{0}', space=vmem, size = 0x8000, scoped, tag = 'input window, operand 1, single buffered']
    #allocation7 [shape = 's32[1]{0}', space=sflag, size = 0x4, scoped, tag = 'scoped memory for tpu_custom_call.1']
    #allocation8 [shape = 'u8[32768]{0}', space=vmem, size = 0x8000, scoped, tag = 'input window, operand 3, single buffered']
    #allocation9 [shape = 'u8[32768]{0}', space=vmem, size = 0x8000, scoped, tag = 'input window, operand 5, single buffered']
    #allocation10 [shape = 's32[1]{0}', space=sflag, size = 0x4, scoped, tag = 'scoped memory for tpu_custom_call.1']
    #allocation11 [shape = 'u8[4096]{0}', space=vmem, size = 0x1000, scoped, tag = 'output window, operand 0, single buffered']
    #allocation12 [shape = 'u8[4096]{0}', space=vmem, size = 0x1000, scoped, tag = 'output window, operand 1, single buffered']
    #allocation13 [shape = 's32[1]{0}', space=sflag, size = 0x4, scoped, tag = 'scoped memory for tpu_custom_call.1']
    %15 = vsyncpa [#allocation4], 0
    %16 = vsyncpa [#allocation7], 0
    %17 = vsyncpa [#allocation10], 0
    %18 = vsyncpa [#allocation5], 0
    %19 = vsyncpa [#allocation13], 0
    // Predicated region
    $region2: #{tpu_custom_call.1} parent=1 // pred_check
      _
    $region3: #{tpu_custom_call.1} parent=1 // pred_check_branch
      %21 = sbr.rel (0) target = $region5
    $region4: #{tpu_custom_call.1} parent=1 // pred_region
      %s23 = ssub.s32 64, 64
      %24 = vsyncadd [#allocation4], %s23
      %s26 = sshll.u32 [#allocation3], 4
      %s27 = int_to_ptr.vmem [resolvable:$true] %s26
      %29 = dma.hbm_to_vmem [thread:$0]  %s0, 64, %s27, [#allocation4]
    $region5: #{tpu_custom_call.1} parent=1 // pred_fallthru
      _
    // Predicated region
    $region6: #{tpu_custom_call.1} parent=1 // pred_check
      _
    $region7: #{tpu_custom_call.1} parent=1 // pred_check_branch
      %31 = sbr.rel (0) target = $region9
    $region8: #{tpu_custom_call.1} parent=1 // pred_region
      %s33 = ssub.s32 1024, 1024
      %34 = vsyncadd [#allocation7], %s33
      %s35 = sshll.u32 [#allocation6], 4
      %s36 = int_to_ptr.vmem [resolvable:$true] %s35
      %41 = dma.hbm_to_vmem [thread:$0]  %s1, 1024, %s36, [#allocation7], 64, 64, 4
    $region9: #{tpu_custom_call.1} parent=1 // pred_fallthru
      _
    // Predicated region
    $region10: #{tpu_custom_call.1} parent=1 // pred_check
      _
    $region11: #{tpu_custom_call.1} parent=1 // pred_check_branch
      %43 = sbr.rel (0) target = $region13
    $region12: #{tpu_custom_call.1} parent=1 // pred_region
      _
    $region13: #{tpu_custom_call.1} parent=1 // pred_fallthru
      _
    // Predicated region
    $region14: #{tpu_custom_call.1} parent=1 // pred_check
      _
    $region15: #{tpu_custom_call.1} parent=1 // pred_check_branch
      %45 = sbr.rel (0) target = $region17
    $region16: #{tpu_custom_call.1} parent=1 // pred_region
      %s47 = ssub.s32 1024, 1024
      %48 = vsyncadd [#allocation7], %s47
      %s49 = sshll.u32 [#allocation8], 4
      %s50 = int_to_ptr.vmem [resolvable:$true] %s49
      %55 = dma.hbm_to_vmem [thread:$0]  %s3, 1024, %s50, [#allocation7], 64, 64, 4
    $region17: #{tpu_custom_call.1} parent=1 // pred_fallthru
      _
    // Predicated region
    $region18: #{tpu_custom_call.1} parent=1 // pred_check
      _
    $region19: #{tpu_custom_call.1} parent=1 // pred_check_branch
      %57 = sbr.rel (0) target = $region21
    $region20: #{tpu_custom_call.1} parent=1 // pred_region
      _
    $region21: #{tpu_custom_call.1} parent=1 // pred_fallthru
      _
    // Predicated region
    $region22: #{tpu_custom_call.1} parent=1 // pred_check
      _
    $region23: #{tpu_custom_call.1} parent=1 // pred_check_branch
      %59 = sbr.rel (0) target = $region25
    $region24: #{tpu_custom_call.1} parent=1 // pred_region
      %s61 = ssub.s32 1024, 1024
      %62 = vsyncadd [#allocation10], %s61
      %s63 = sshll.u32 [#allocation9], 4
      %s64 = int_to_ptr.vmem [resolvable:$true] %s63
      %69 = dma.hbm_to_vmem [thread:$0]  %s5, 1024, %s64, [#allocation10], 64, 64, 4
    $region25: #{tpu_custom_call.1} parent=1 // pred_fallthru
      _
    // Predicated region
    $region26: #{tpu_custom_call.1} parent=1 // pred_check
      _
    $region27: #{tpu_custom_call.1} parent=1 // pred_check_branch
      %71 = sbr.rel (0) target = $region29
    $region28: #{tpu_custom_call.1} parent=1 // pred_region
      _
    $region29: #{tpu_custom_call.1} parent=1 // pred_fallthru
      _
    // Predicated region
    $region30: #{tpu_custom_call.1} parent=1 // pred_check
      _
    $region31: #{tpu_custom_call.1} parent=1 // pred_check_branch
      %73 = sbr.rel (0) target = $region33
    $region32: #{tpu_custom_call.1} parent=1 // pred_region
      %74 = dma.done [#allocation4], 64
    $region33: #{tpu_custom_call.1} parent=1 // pred_fallthru
      _
    // Predicated region
    $region34: #{tpu_custom_call.1} parent=1 // pred_check
      _
    $region35: #{tpu_custom_call.1} parent=1 // pred_check_branch
      %76 = sbr.rel (0) target = $region37
    $region36: #{tpu_custom_call.1} parent=1 // pred_region
      %77 = dma.done [#allocation7], 1024
    $region37: #{tpu_custom_call.1} parent=1 // pred_fallthru
      _
    // Predicated region
    $region38: #{tpu_custom_call.1} parent=1 // pred_check
      _
    $region39: #{tpu_custom_call.1} parent=1 // pred_check_branch
      %79 = sbr.rel (0) target = $region41
    $region40: #{tpu_custom_call.1} parent=1 // pred_region
      %80 = dma.done [#allocation7], 1024
    $region41: #{tpu_custom_call.1} parent=1 // pred_fallthru
      _
    // Predicated region
    $region42: #{tpu_custom_call.1} parent=1 // pred_check
      _
    $region43: #{tpu_custom_call.1} parent=1 // pred_check_branch
      %82 = sbr.rel (0) target = $region45
    $region44: #{tpu_custom_call.1} parent=1 // pred_region
      %83 = dma.done [#allocation10], 1024
    $region45: #{tpu_custom_call.1} parent=1 // pred_fallthru
      _
    %v85 = vld [vmem:[#allocation3] sm:$0xf]
    %v86 = vld [vmem:[#allocation6] sm:$0xf]
    %v87 = vld [vmem:[#allocation6 + $0x4] sm:$0xf]
    %v88 = vld [vmem:[#allocation6 + $0x8] sm:$0xf]
    %v89 = vld [vmem:[#allocation6 + $0xc] sm:$0xf]
    %v90 = vld [vmem:[#allocation6 + $0x10] sm:$0xf]
    %v91 = vld [vmem:[#allocation6 + $0x14] sm:$0xf]
    %v92 = vld [vmem:[#allocation6 + $0x18] sm:$0xf]
    %v93 = vld [vmem:[#allocation6 + $0x1c] sm:$0xf]
    %v94 = vld [vmem:[#allocation6 + $0x20] sm:$0xf]
    %v95 = vld [vmem:[#allocation6 + $0x24] sm:$0xf]
    %v96 = vld [vmem:[#allocation6 + $0x28] sm:$0xf]
    %v97 = vld [vmem:[#allocation6 + $0x2c] sm:$0xf]
    %v98 = vld [vmem:[#allocation6 + $0x30] sm:$0xf]
    %v99 = vld [vmem:[#allocation6 + $0x34] sm:$0xf]
    %v100 = vld [vmem:[#allocation6 + $0x38] sm:$0xf]
    %v101 = vld [vmem:[#allocation6 + $0x3c] sm:$0xf]
    %v102 = vld [vmem:[%s2] sm:$0x1]
    %v104 = vlaneseq
    %v105 = vshrl.u32 %v104, 7
    %v106 = vsub.s32 0, %v105
    %v107 = vrot.slane %v102, %v106
    %v125 = vunpack.c.l.b16 %v86
    %v126 = vunpack.c.l.b16 %v87
    %v127 = vunpack.c.l.b16 %v88
    %v128 = vunpack.c.l.b16 %v89
    %v129 = vunpack.c.l.b16 %v90
    %v130 = vunpack.c.l.b16 %v91
    %v131 = vunpack.c.l.b16 %v92
    %v132 = vunpack.c.l.b16 %v93
    %v133 = vunpack.c.l.b16 %v94
    %v134 = vunpack.c.l.b16 %v95
    %v135 = vunpack.c.l.b16 %v96
    %v136 = vunpack.c.l.b16 %v97
    %v137 = vunpack.c.l.b16 %v98
    %v138 = vunpack.c.l.b16 %v99
    %v139 = vunpack.c.l.b16 %v100
    %v140 = vunpack.c.l.b16 %v101
    %v141 = vpack.c.b16 %v126, %v125
    %v142 = vpack.c.b16 %v128, %v127
    %v143 = vpack.c.b16 %v130, %v129
    %v144 = vpack.c.b16 %v132, %v131
    %v145 = vpack.c.b16 %v134, %v133
    %v146 = vpack.c.b16 %v136, %v135
    %v147 = vpack.c.b16 %v138, %v137
    %v148 = vpack.c.b16 %v140, %v139
    %157 = vmatprep.subr.bf16.mxu0 0
    %158 = vmatpush1.bf16.msra.mxu0 %v141
    %159 = vmatprep.subr.bf16.mxu0 0
    %160 = vmatpush1.bf16.msra.mxu0 %v142
    %161 = vmatprep.subr.bf16.mxu0 0
    %162 = vmatpush1.bf16.msra.mxu0 %v143
    %163 = vmatprep.subr.bf16.mxu0 0
    %164 = vmatpush1.bf16.msra.mxu0 %v144
    %165 = vmatprep.subr.bf16.mxu0 0
    %166 = vmatpush1.bf16.msra.mxu0 %v145
    %167 = vmatprep.subr.bf16.mxu0 0
    %168 = vmatpush1.bf16.msra.mxu0 %v146
    %169 = vmatprep.subr.bf16.mxu0 0
    %170 = vmatpush1.bf16.msra.mxu0 %v147
    %171 = vmatprep.subr.bf16.mxu0 0
    %172 = vmatpush1.bf16.msra.mxu0 %v148
    %173 = vmatprep.subr.bf16.mxu0 0
    %174 = vmatpush1.bf16.msra.mxu0 0
    %175 = vmatprep.subr.bf16.mxu0 0
    %176 = vmatpush1.bf16.msra.mxu0 0
    %177 = vmatprep.subr.bf16.mxu0 0
    %178 = vmatpush1.bf16.msra.mxu0 0
    %179 = vmatprep.subr.bf16.mxu0 0
    %180 = vmatpush1.bf16.msra.mxu0 0
    %181 = vmatprep.subr.bf16.mxu0 0
    %182 = vmatpush1.bf16.msra.mxu0 0
    %183 = vmatprep.subr.bf16.mxu0 0
    %184 = vmatpush1.bf16.msra.mxu0 0
    %185 = vmatprep.subr.bf16.mxu0 0
    %186 = vmatpush1.bf16.msra.mxu0 0
    %187 = vmatprep.subr.bf16.mxu0 0
    %188 = vmatpush1.bf16.msra.mxu0 0
    %189 = vmatprep.mubr.bf16.mxu0 0
    %190 = vmatmul.mubr.bf16.gmra.mrb[0].mxu0 %v85
    %v191 = vpop.f32.mrb[0].mxu0
    %v192 = vadd.f32 %v107, %v191
    %v193 = vpop.f32.mrb[0].mxu0
    %v194 = vpop.f32.mrb[0].mxu0
    %v195 = vpop.f32.mrb[0].mxu0
    %196 = vdwg.mxu0
    %v197 = vmax.f32 %v192, 0.0
    %v198 = vld [vmem:[#allocation8] sm:$0xf]
    %v199 = vld [vmem:[#allocation8 + $0x4] sm:$0xf]
    %v200 = vld [vmem:[#allocation8 + $0x8] sm:$0xf]
    %v201 = vld [vmem:[#allocation8 + $0xc] sm:$0xf]
    %v202 = vld [vmem:[#allocation8 + $0x10] sm:$0xf]
    %v203 = vld [vmem:[#allocation8 + $0x14] sm:$0xf]
    %v204 = vld [vmem:[#allocation8 + $0x18] sm:$0xf]
    %v205 = vld [vmem:[#allocation8 + $0x1c] sm:$0xf]
    %v206 = vld [vmem:[#allocation8 + $0x20] sm:$0xf]
    %v207 = vld [vmem:[#allocation8 + $0x24] sm:$0xf]
    %v208 = vld [vmem:[#allocation8 + $0x28] sm:$0xf]
    %v209 = vld [vmem:[#allocation8 + $0x2c] sm:$0xf]
    %v210 = vld [vmem:[#allocation8 + $0x30] sm:$0xf]
    %v211 = vld [vmem:[#allocation8 + $0x34] sm:$0xf]
    %v212 = vld [vmem:[#allocation8 + $0x38] sm:$0xf]
    %v213 = vld [vmem:[#allocation8 + $0x3c] sm:$0xf]
    %v214 = vld [vmem:[%s4] sm:$0x1]
    %v215 = vpack.c.bf16 %v197, %v197
    %v217 = vlaneseq
    %v218 = vshrl.u32 %v217, 7
    %v219 = vsub.s32 0, %v218
    %v220 = vrot.slane %v214, %v219
    %v238 = vunpack.c.l.b16 %v198
    %v239 = vunpack.c.l.b16 %v199
    %v240 = vunpack.c.l.b16 %v200
    %v241 = vunpack.c.l.b16 %v201
    %v242 = vunpack.c.l.b16 %v202
    %v243 = vunpack.c.l.b16 %v203
    %v244 = vunpack.c.l.b16 %v204
    %v245 = vunpack.c.l.b16 %v205
    %v246 = vunpack.c.l.b16 %v206
    %v247 = vunpack.c.l.b16 %v207
    %v248 = vunpack.c.l.b16 %v208
    %v249 = vunpack.c.l.b16 %v209
    %v250 = vunpack.c.l.b16 %v210
    %v251 = vunpack.c.l.b16 %v211
    %v252 = vunpack.c.l.b16 %v212
    %v253 = vunpack.c.l.b16 %v213
    %v254 = vpack.c.b16 %v239, %v238
    %v255 = vpack.c.b16 %v241, %v240
    %v256 = vpack.c.b16 %v243, %v242
    %v257 = vpack.c.b16 %v245, %v244
    %v258 = vpack.c.b16 %v247, %v246
    %v259 = vpack.c.b16 %v249, %v248
    %v260 = vpack.c.b16 %v251, %v250
    %v261 = vpack.c.b16 %v253, %v252
    %270 = vmatprep.subr.bf16.mxu0 0
    %271 = vmatpush1.bf16.msra.mxu0 %v254
    %272 = vmatprep.subr.bf16.mxu0 0
    %273 = vmatpush1.bf16.msra.mxu0 %v255
    %274 = vmatprep.subr.bf16.mxu0 0
    %275 = vmatpush1.bf16.msra.mxu0 %v256
    %276 = vmatprep.subr.bf16.mxu0 0
    %277 = vmatpush1.bf16.msra.mxu0 %v257
    %278 = vmatprep.subr.bf16.mxu0 0
    %279 = vmatpush1.bf16.msra.mxu0 %v258
    %280 = vmatprep.subr.bf16.mxu0 0
    %281 = vmatpush1.bf16.msra.mxu0 %v259
    %282 = vmatprep.subr.bf16.mxu0 0
    %283 = vmatpush1.bf16.msra.mxu0 %v260
    %284 = vmatprep.subr.bf16.mxu0 0
    %285 = vmatpush1.bf16.msra.mxu0 %v261
    %286 = vmatprep.subr.bf16.mxu0 0
    %287 = vmatpush1.bf16.msra.mxu0 0
    %288 = vmatprep.subr.bf16.mxu0 0
    %289 = vmatpush1.bf16.msra.mxu0 0
    %290 = vmatprep.subr.bf16.mxu0 0
    %291 = vmatpush1.bf16.msra.mxu0 0
    %292 = vmatprep.subr.bf16.mxu0 0
    %293 = vmatpush1.bf16.msra.mxu0 0
    %294 = vmatprep.subr.bf16.mxu0 0
    %295 = vmatpush1.bf16.msra.mxu0 0
    %296 = vmatprep.subr.bf16.mxu0 0
    %297 = vmatpush1.bf16.msra.mxu0 0
    %298 = vmatprep.subr.bf16.mxu0 0
    %299 = vmatpush1.bf16.msra.mxu0 0
    %300 = vmatprep.subr.bf16.mxu0 0
    %301 = vmatpush1.bf16.msra.mxu0 0
    %302 = vmatprep.mubr.bf16.mxu0 0
    %303 = vmatmul.mubr.bf16.gmra.mrb[0].mxu0 %v215
    %v304 = vpop.f32.mrb[0].mxu0
    %v305 = vadd.f32 %v220, %v304
    %v306 = vpop.f32.mrb[0].mxu0
    %v307 = vpop.f32.mrb[0].mxu0
    %v308 = vpop.f32.mrb[0].mxu0
    %309 = vdwg.mxu0
    %v310 = vmax.f32 %v305, 0.0
    %v311 = vld [vmem:[#allocation9] sm:$0xf]
    %v312 = vld [vmem:[#allocation9 + $0x4] sm:$0xf]
    %v313 = vld [vmem:[#allocation9 + $0x8] sm:$0xf]
    %v314 = vld [vmem:[#allocation9 + $0xc] sm:$0xf]
    %v315 = vld [vmem:[#allocation9 + $0x10] sm:$0xf]
    %v316 = vld [vmem:[#allocation9 + $0x14] sm:$0xf]
    %v317 = vld [vmem:[#allocation9 + $0x18] sm:$0xf]
    %v318 = vld [vmem:[#allocation9 + $0x1c] sm:$0xf]
    %v319 = vld [vmem:[#allocation9 + $0x20] sm:$0xf]
    %v320 = vld [vmem:[#allocation9 + $0x24] sm:$0xf]
    %v321 = vld [vmem:[#allocation9 + $0x28] sm:$0xf]
    %v322 = vld [vmem:[#allocation9 + $0x2c] sm:$0xf]
    %v323 = vld [vmem:[#allocation9 + $0x30] sm:$0xf]
    %v324 = vld [vmem:[#allocation9 + $0x34] sm:$0xf]
    %v325 = vld [vmem:[#allocation9 + $0x38] sm:$0xf]
    %v326 = vld [vmem:[#allocation9 + $0x3c] sm:$0xf]
    %v327 = vpack.c.bf16 %v310, %v310
    %v344 = vunpack.c.l.b16 %v311
    %v345 = vunpack.c.l.b16 %v312
    %v346 = vunpack.c.l.b16 %v313
    %v347 = vunpack.c.l.b16 %v314
    %v348 = vunpack.c.l.b16 %v315
    %v349 = vunpack.c.l.b16 %v316
    %v350 = vunpack.c.l.b16 %v317
    %v351 = vunpack.c.l.b16 %v318
    %v352 = vunpack.c.l.b16 %v319
    %v353 = vunpack.c.l.b16 %v320
    %v354 = vunpack.c.l.b16 %v321
    %v355 = vunpack.c.l.b16 %v322
    %v356 = vunpack.c.l.b16 %v323
    %v357 = vunpack.c.l.b16 %v324
    %v358 = vunpack.c.l.b16 %v325
    %v359 = vunpack.c.l.b16 %v326
    %v360 = vpack.c.b16 %v345, %v344
    %v361 = vpack.c.b16 %v347, %v346
    %v362 = vpack.c.b16 %v349, %v348
    %v363 = vpack.c.b16 %v351, %v350
    %v364 = vpack.c.b16 %v353, %v352
    %v365 = vpack.c.b16 %v355, %v354
    %v366 = vpack.c.b16 %v357, %v356
    %v367 = vpack.c.b16 %v359, %v358
    %376 = vmatprep.subr.bf16.mxu0 0
    %377 = vmatpush1.bf16.msra.mxu0 %v360
    %378 = vmatprep.subr.bf16.mxu0 0
    %379 = vmatpush1.bf16.msra.mxu0 %v361
    %380 = vmatprep.subr.bf16.mxu0 0
    %381 = vmatpush1.bf16.msra.mxu0 %v362
    %382 = vmatprep.subr.bf16.mxu0 0
    %383 = vmatpush1.bf16.msra.mxu0 %v363
    %384 = vmatprep.subr.bf16.mxu0 0
    %385 = vmatpush1.bf16.msra.mxu0 %v364
    %386 = vmatprep.subr.bf16.mxu0 0
    %387 = vmatpush1.bf16.msra.mxu0 %v365
    %388 = vmatprep.subr.bf16.mxu0 0
    %389 = vmatpush1.bf16.msra.mxu0 %v366
    %390 = vmatprep.subr.bf16.mxu0 0
    %391 = vmatpush1.bf16.msra.mxu0 %v367
    %392 = vmatprep.subr.bf16.mxu0 0
    %393 = vmatpush1.bf16.msra.mxu0 0
    %394 = vmatprep.subr.bf16.mxu0 0
    %395 = vmatpush1.bf16.msra.mxu0 0
    %396 = vmatprep.subr.bf16.mxu0 0
    %397 = vmatpush1.bf16.msra.mxu0 0
    %398 = vmatprep.subr.bf16.mxu0 0
    %399 = vmatpush1.bf16.msra.mxu0 0
    %400 = vmatprep.subr.bf16.mxu0 0
    %401 = vmatpush1.bf16.msra.mxu0 0
    %402 = vmatprep.subr.bf16.mxu0 0
    %403 = vmatpush1.bf16.msra.mxu0 0
    %404 = vmatprep.subr.bf16.mxu0 0
    %405 = vmatpush1.bf16.msra.mxu0 0
    %406 = vmatprep.subr.bf16.mxu0 0
    %407 = vmatpush1.bf16.msra.mxu0 0
    %408 = vmatprep.mubr.bf16.mxu0 0
    %409 = vmatmul.mubr.bf16.gmra.mrb[0].mxu0 %v327
    %v410 = vpop.f32.mrb[0].mxu0
    %v411 = vadd.f32 0.0, %v410
    %v412 = vpop.f32.mrb[0].mxu0
    %v413 = vpop.f32.mrb[0].mxu0
    %v414 = vpop.f32.mrb[0].mxu0
    %415 = vdwg.mxu0
    %416 = vst [vmem:[#allocation12] sm:$0xff] %v411
    %s417 = sld [smem:[#allocation2]]
    %v418 = vmul.f32 %v411, %v411
    %419 = vadd.xlane.f32.xlu0 %v418
    %v420 = vpop.xlane.xlu0 %419
    %v421 = vrsqrt.pop %v420
    %v422 = vstv %s417
    %v423 = vmul.f32 %v421, %v422
    %v424 = vmul.f32 %v411, %v423
    %425 = vst [vmem:[#allocation11] sm:$0xff] %v424
    // Predicated region
    $region46: #{tpu_custom_call.1} parent=1 // pred_check
      _
    $region47: #{tpu_custom_call.1} parent=1 // pred_check_branch
      %427 = sbr.rel (0) target = $region49
    $region48: #{tpu_custom_call.1} parent=1 // pred_region
      %s429 = ssub.s32 128, 128
      %430 = vsyncadd [#allocation5], %s429
      %s432 = sshll.u32 [#allocation11], 4
      %s433 = int_to_ptr.vmem [resolvable:$true] %s432
      %435 = dma.vmem_to_hbm [thread:$0]  %s433, 128, %s7, [#allocation5]
    $region49: #{tpu_custom_call.1} parent=1 // pred_fallthru
      _
    // Predicated region
    $region50: #{tpu_custom_call.1} parent=1 // pred_check
      _
    $region51: #{tpu_custom_call.1} parent=1 // pred_check_branch
      %437 = sbr.rel (0) target = $region53
    $region52: #{tpu_custom_call.1} parent=1 // pred_region
      %s439 = ssub.s32 128, 128
      %440 = vsyncadd [#allocation13], %s439
      %s442 = sshll.u32 [#allocation12], 4
      %s443 = int_to_ptr.vmem [resolvable:$true] %s442
      %445 = dma.vmem_to_hbm [thread:$0]  %s443, 128, %s8, [#allocation13]
    $region53: #{tpu_custom_call.1} parent=1 // pred_fallthru
      _
    // Predicated region
    $region54: #{tpu_custom_call.1} parent=1 // pred_check
      _
    $region55: #{tpu_custom_call.1} parent=1 // pred_check_branch
      %447 = sbr.rel (0) target = $region57
    $region56: #{tpu_custom_call.1} parent=1 // pred_region
      %448 = dma.done [#allocation5], 128
    $region57: #{tpu_custom_call.1} parent=1 // pred_fallthru
      _
    // Predicated region
    $region58: #{tpu_custom_call.1} parent=1 // pred_check
      _
    $region59: #{tpu_custom_call.1} parent=1 // pred_check_branch
      %450 = sbr.rel (0) target = $region61
    $region60: #{tpu_custom_call.1} parent=1 // pred_region
      %451 = dma.done [#allocation13], 128
    $region61: #{tpu_custom_call.1} parent=1 // pred_fallthru
      _
    %452 = vsyncpa [#allocation4], 1
    %453 = vsyncpa [#allocation7], 1
    %454 = vsyncpa [#allocation10], 1
    %455 = vsyncpa [#allocation5], 1
    %456 = vsyncpa [#allocation13], 1

</llo_original>
